<compile_context>
chip_gen: v5e
topology: v5e:2x2
jax: 0.10.0
libtpu: 0.0.40
codegen_flags: <defaults>
</compile_context>

<pallas_src>
import functools

import jax
import jax.numpy as jnp
from jax.experimental import pallas as pl
from jax.experimental.pallas import tpu as pltpu

SUBLANE = 8  # f32 sublane count


def _round_up(n, m):
    return ((n + m - 1) // m) * m


def _cdiv(a, b):
    return (a + b - 1) // b


def _qnet_kernel(x_ref, w1_ref, b1_ref, w2_ref, b2_ref, w3_ref, b3_ref, o_ref):
    """One batch tile of the 3-layer MLP.

    Matmuls run in the operand dtype (bf16 by default, f32 optional) with f32 MXU
    accumulation; bias-add + ReLU epilogue stays in f32 (v5e-safe).
    """
    x = x_ref[...]
    mm_dtype = x.dtype
    # Layer 1: (tile, in) @ (in, hidden)
    h1 = jnp.dot(x, w1_ref[...], preferred_element_type=jnp.float32) + b1_ref[...]
    h1 = jnp.maximum(h1, 0.0).astype(mm_dtype)
    # Layer 2: (tile, hidden) @ (hidden, hidden)
    h2 = jnp.dot(h1, w2_ref[...], preferred_element_type=jnp.float32) + b2_ref[...]
    h2 = jnp.maximum(h2, 0.0).astype(mm_dtype)
    # Layer 3 (no activation): (tile, hidden) @ (hidden, out) -> only the real output columns
    out = jnp.dot(h2, w3_ref[...], preferred_element_type=jnp.float32) + b3_ref[...]
    o_ref[...] = out.astype(o_ref.dtype)


def init_params(key, input_size, hidden_size, output_size):
    """Mimic PyTorch nn.Linear init (uniform +/- 1/sqrt(fan_in)); W stored (in, out)."""
    def linear_init(k, fan_in, fan_out):
        kw, kb = jax.random.split(k)
        bound = 1.0 / jnp.sqrt(jnp.float32(fan_in))
        w = jax.random.uniform(kw, (fan_in, fan_out), jnp.float32, -bound, bound)
        b = jax.random.uniform(kb, (1, fan_out), jnp.float32, -bound, bound)
        return w, b

    k1, k2, k3 = jax.random.split(key, 3)
    w1, b1 = linear_init(k1, input_size, hidden_size)
    w2, b2 = linear_init(k2, hidden_size, hidden_size)
    w3, b3 = linear_init(k3, hidden_size, output_size)
    return {"w1": w1, "b1": b1, "w2": w2, "b2": b2, "w3": w3, "b3": b3}


@functools.partial(jax.jit, static_argnames=("batch_tile", "use_bf16"))
def linear_qnet_forward(x, params, *, batch_tile=1024, use_bf16=True):
    """x: (B, input_size). params: dict of natural-shape weights/biases from init_params."""
    B, in_size = x.shape
    hidden = params["w1"].shape[1]
    out_size = params["w3"].shape[1]

    # ---- batch tiling (only the batch axis is padded, to a sublane multiple) ----
    Bp = _round_up(max(B, 1), SUBLANE)
    num_tiles = _cdiv(Bp, batch_tile)
    # v7x megacore: ensure moderate batches produce >= 2 grid steps so the "parallel"
    # grid axis can be sharded across both TensorCores (no-op on v5e/v6e single-TC).
    if num_tiles == 1 and Bp >= 16 * SUBLANE:
        num_tiles = 2
    tile = _round_up(_cdiv(Bp, num_tiles), SUBLANE)
    grid_n = _cdiv(Bp, tile)
    Bp = tile * grid_n                      # padding waste < SUBLANE rows per tile

    if Bp != B:
        x = jnp.pad(x, ((0, Bp - B), (0, 0)))

    # bf16 matmul operands by default (bf16-native MXU on all generations); f32 epilogue.
    mm_dtype = jnp.bfloat16 if use_bf16 else jnp.float32
    x_in = x.astype(mm_dtype)
    w1 = params["w1"].astype(mm_dtype)
    w2 = params["w2"].astype(mm_dtype)
    w3 = params["w3"].astype(mm_dtype)
    b1 = params["b1"].astype(jnp.float32)
    b2 = params["b2"].astype(jnp.float32)
    b3 = params["b3"].astype(jnp.float32)

    const = lambda i: (0, 0)  # grid-invariant blocks: DMA'd once, resident in VMEM

    out = pl.pallas_call(
        _qnet_kernel,
        out_shape=jax.ShapeDtypeStruct((Bp, out_size), jnp.float32),
        grid=(grid_n,),
        in_specs=[
            pl.BlockSpec((tile, in_size), lambda i: (i, 0)),   # x at natural feature width
            pl.BlockSpec((in_size, hidden), const),            # w1
            pl.BlockSpec((1, hidden), const),                  # b1
            pl.BlockSpec((hidden, hidden), const),             # w2
            pl.BlockSpec((1, hidden), const),                  # b2
            pl.BlockSpec((hidden, out_size), const),           # w3 (real output columns only)
            pl.BlockSpec((1, out_size), const),                # b3
        ],
        out_specs=pl.BlockSpec((tile, out_size), lambda i: (i, 0)),  # narrow writeback
        compiler_params=pltpu.CompilerParams(
            dimension_semantics=("parallel",),                 # batch tiles split across TCs
        ),
    )(x_in, w1, b1, w2, b2, w3, b3)

    return out if Bp == B else out[:B]


def reference_forward(x, p):
    h1 = jnp.maximum(x @ p["w1"] + p["b1"], 0.0)
    h2 = jnp.maximum(h1 @ p["w2"] + p["b2"], 0.0)
    return h2 @ p["w3"] + p["b3"]


def reference_forward_bf16(x, p):
    """Same arithmetic as the default kernel path: bf16 operands, f32 accumulate/epilogue."""
    c = lambda a: a.astype(jnp.bfloat16)
    h1 = jnp.maximum(jnp.dot(c(x), c(p["w1"]), preferred_element_type=jnp.float32) + p["b1"], 0.0)
    h2 = jnp.maximum(jnp.dot(c(h1), c(p["w2"]), preferred_element_type=jnp.float32) + p["b2"], 0.0)
    return jnp.dot(c(h2), c(p["w3"]), preferred_element_type=jnp.float32) + p["b3"]


# TODO(synk): Linear_QNet.save() (torch.save checkpoint I/O) is host-side and has no kernel equivalent.

if __name__ == "__main__":
    # Snake-RL style sizes: 11 state features -> hidden 32 -> 3 actions; batch=2.
    input_size, hidden_size, output_size = 11, 32, 3
    batch = 2

    key = jax.random.PRNGKey(0)
    kx, kp, kx2 = jax.random.split(key, 3)
    x = jax.random.normal(kx, (batch, input_size), jnp.float32)
    params = init_params(kp, input_size, hidden_size, output_size)

    # 1) Default path (bf16 operands, f32 accumulate): tight match vs matching bf16 reference.
    out = linear_qnet_forward(x, params)
    out = jax.block_until_ready(out)
    ref_bf16 = reference_forward_bf16(x, params)
    assert out.shape == (batch, output_size)
    assert jnp.allclose(out, ref_bf16, atol=2e-3, rtol=2e-3)

    # 2) f32-operand path: both sides use default (multi-pass MXU) f32 matmul precision, but
    #    Mosaic/XLA pass counts may differ, so compare with a loose tolerance (sanity check only).
    out_f32 = linear_qnet_forward(x, params, use_bf16=False)
    out_f32 = jax.block_until_ready(out_f32)
    ref_f32 = reference_forward(x, params)
    assert jnp.allclose(out_f32, ref_f32, atol=2e-2, rtol=2e-2)

    # 3) Multi-tile batch grid path (tiny tile chosen just to exercise grid > 1 + row padding).
    x_big = jax.random.normal(kx2, (20, input_size), jnp.float32)
    out_big = linear_qnet_forward(x_big, params, batch_tile=8)
    out_big = jax.block_until_ready(out_big)
    ref_big = reference_forward_bf16(x_big, params)
    assert out_big.shape == (20, output_size)
    assert jnp.allclose(out_big, ref_big, atol=2e-3, rtol=2e-3)

    print("KERNEL_OK")
</pallas_src>

<mosaic_0001>
module attributes {stable_mosaic.version = 11 : i64} {
  func.func @_qnet_kernel(%arg0: i32, %arg1: memref<8x11xbf16, #tpu.memory_space<vmem>>, %arg2: memref<11x32xbf16, #tpu.memory_space<vmem>>, %arg3: memref<1x32xf32, #tpu.memory_space<vmem>>, %arg4: memref<32x32xbf16, #tpu.memory_space<vmem>>, %arg5: memref<1x32xf32, #tpu.memory_space<vmem>>, %arg6: memref<32x3xbf16, #tpu.memory_space<vmem>>, %arg7: memref<1x3xf32, #tpu.memory_space<vmem>>, %arg8: memref<8x3xf32, #tpu.memory_space<vmem>>) attributes {dimension_semantics = [#tpu.dimension_semantics<parallel>], iteration_bounds = array<i64: 1>, scalar_prefetch = 0 : i64, scratch_operands = 0 : i64, tpu.core_type = #tpu.core_type<tc>, window_params = [{transform_indices = @transform_0, window_bounds = array<i64: 8, 11>}, {pipeline_mode = #tpu.pipeline_mode<synchronous>, transform_indices = @transform_1, window_bounds = array<i64: 11, 32>}, {pipeline_mode = #tpu.pipeline_mode<synchronous>, transform_indices = @transform_2, window_bounds = array<i64: 1, 32>}, {pipeline_mode = #tpu.pipeline_mode<synchronous>, transform_indices = @transform_3, window_bounds = array<i64: 32, 32>}, {pipeline_mode = #tpu.pipeline_mode<synchronous>, transform_indices = @transform_4, window_bounds = array<i64: 1, 32>}, {pipeline_mode = #tpu.pipeline_mode<synchronous>, transform_indices = @transform_5, window_bounds = array<i64: 32, 3>}, {pipeline_mode = #tpu.pipeline_mode<synchronous>, transform_indices = @transform_6, window_bounds = array<i64: 1, 3>}, {transform_indices = @transform_7, window_bounds = array<i64: 8, 3>}]} {
    %c0 = arith.constant 0 : index
    %c0_0 = arith.constant 0 : index
    %0 = vector.load %arg1[%c0, %c0_0] : memref<8x11xbf16, #tpu.memory_space<vmem>>, vector<8x11xbf16>
    %c0_1 = arith.constant 0 : index
    %c0_2 = arith.constant 0 : index
    %1 = vector.load %arg2[%c0_1, %c0_2] : memref<11x32xbf16, #tpu.memory_space<vmem>>, vector<11x32xbf16>
    %cst = arith.constant dense<0.000000e+00> : vector<8x32xf32>
    %2 = tpu.matmul %0, %1, %cst {dimension_numbers = #tpu.dot_dimension_numbers<[1], [0], [0], [1], [0, 0, 1, 1], [], []>} : vector<8x11xbf16>, vector<11x32xbf16>, vector<8x32xf32> -> vector<8x32xf32>
    %c0_3 = arith.constant 0 : index
    %c0_4 = arith.constant 0 : index
    %3 = vector.load %arg3[%c0_3, %c0_4] : memref<1x32xf32, #tpu.memory_space<vmem>>, vector<1x32xf32>
    %4 = vector.broadcast %3 : vector<1x32xf32> to vector<8x32xf32>
    %5 = arith.addf %2, %4 : vector<8x32xf32>
    %cst_5 = arith.constant 0.000000e+00 : f32
    %6 = vector.broadcast %cst_5 : f32 to vector<8x32xf32>
    %7 = arith.maximumf %5, %6 : vector<8x32xf32>
    %8 = arith.truncf %7 : vector<8x32xf32> to vector<8x32xbf16>
    %c0_6 = arith.constant 0 : index
    %c0_7 = arith.constant 0 : index
    %9 = vector.load %arg4[%c0_6, %c0_7] : memref<32x32xbf16, #tpu.memory_space<vmem>>, vector<32x32xbf16>
    %cst_8 = arith.constant dense<0.000000e+00> : vector<8x32xf32>
    %10 = tpu.matmul %8, %9, %cst_8 {dimension_numbers = #tpu.dot_dimension_numbers<[1], [0], [0], [1], [0, 0, 1, 1], [], []>} : vector<8x32xbf16>, vector<32x32xbf16>, vector<8x32xf32> -> vector<8x32xf32>
    %c0_9 = arith.constant 0 : index
    %c0_10 = arith.constant 0 : index
    %11 = vector.load %arg5[%c0_9, %c0_10] : memref<1x32xf32, #tpu.memory_space<vmem>>, vector<1x32xf32>
    %12 = vector.broadcast %11 : vector<1x32xf32> to vector<8x32xf32>
    %13 = arith.addf %10, %12 : vector<8x32xf32>
    %cst_11 = arith.constant 0.000000e+00 : f32
    %14 = vector.broadcast %cst_11 : f32 to vector<8x32xf32>
    %15 = arith.maximumf %13, %14 : vector<8x32xf32>
    %16 = arith.truncf %15 : vector<8x32xf32> to vector<8x32xbf16>
    %c0_12 = arith.constant 0 : index
    %c0_13 = arith.constant 0 : index
    %17 = vector.load %arg6[%c0_12, %c0_13] : memref<32x3xbf16, #tpu.memory_space<vmem>>, vector<32x3xbf16>
    %cst_14 = arith.constant dense<0.000000e+00> : vector<8x3xf32>
    %18 = tpu.matmul %16, %17, %cst_14 {dimension_numbers = #tpu.dot_dimension_numbers<[1], [0], [0], [1], [0, 0, 1, 1], [], []>} : vector<8x32xbf16>, vector<32x3xbf16>, vector<8x3xf32> -> vector<8x3xf32>
    %c0_15 = arith.constant 0 : index
    %c0_16 = arith.constant 0 : index
    %19 = vector.load %arg7[%c0_15, %c0_16] : memref<1x3xf32, #tpu.memory_space<vmem>>, vector<1x3xf32>
    %20 = vector.broadcast %19 : vector<1x3xf32> to vector<8x3xf32>
    %21 = arith.addf %18, %20 : vector<8x3xf32>
    %c0_17 = arith.constant 0 : index
    %c0_18 = arith.constant 0 : index
    %22 = vector.load %arg8[%c0_17, %c0_18] : memref<8x3xf32, #tpu.memory_space<vmem>>, vector<8x3xf32>
    tpu.vector_store %arg8[%c0_17, %c0_18], %21 {strides = array<i32>} : memref<8x3xf32, #tpu.memory_space<vmem>>, vector<8x3xf32>,
    return
  }
  func.func @transform_0(%arg0: i32) -> (i32, i32) {
    %c0_i32 = arith.constant 0 : i32
    %c0_i32_0 = arith.constant 0 : i32
    return %arg0, %c0_i32 : i32, i32
  }
  func.func @transform_1(%arg0: i32) -> (i32, i32) {
    %c0_i32 = arith.constant 0 : i32
    %c0_i32_0 = arith.constant 0 : i32
    %c0_i32_1 = arith.constant 0 : i32
    return %c0_i32, %c0_i32_0 : i32, i32
  }
  func.func @transform_2(%arg0: i32) -> (i32, i32) {
    %c0_i32 = arith.constant 0 : i32
    %c0_i32_0 = arith.constant 0 : i32
    %c0_i32_1 = arith.constant 0 : i32
    return %c0_i32, %c0_i32_0 : i32, i32
  }
  func.func @transform_3(%arg0: i32) -> (i32, i32) {
    %c0_i32 = arith.constant 0 : i32
    %c0_i32_0 = arith.constant 0 : i32
    %c0_i32_1 = arith.constant 0 : i32
    return %c0_i32, %c0_i32_0 : i32, i32
  }
  func.func @transform_4(%arg0: i32) -> (i32, i32) {
    %c0_i32 = arith.constant 0 : i32
    %c0_i32_0 = arith.constant 0 : i32
    %c0_i32_1 = arith.constant 0 : i32
    return %c0_i32, %c0_i32_0 : i32, i32
  }
  func.func @transform_5(%arg0: i32) -> (i32, i32) {
    %c0_i32 = arith.constant 0 : i32
    %c0_i32_0 = arith.constant 0 : i32
    %c0_i32_1 = arith.constant 0 : i32
    return %c0_i32, %c0_i32_0 : i32, i32
  }
  func.func @transform_6(%arg0: i32) -> (i32, i32) {
    %c0_i32 = arith.constant 0 : i32
    %c0_i32_0 = arith.constant 0 : i32
    %c0_i32_1 = arith.constant 0 : i32
    return %c0_i32, %c0_i32_0 : i32, i32
  }
  func.func @transform_7(%arg0: i32) -> (i32, i32) {
    %c0_i32 = arith.constant 0 : i32
    %c0_i32_0 = arith.constant 0 : i32
    return %arg0, %c0_i32 : i32, i32
  }
}

</mosaic_0001>

<llo_original>
// kernel: linear_qnet_forward.1
$region0: #{linear_qnet_forward.1}
  #allocation0 [shape = 'u32[]', space=smem, size = 0x4, offset = 0x4, fixed_abs, tag = 'smem constant byte address 0x4 - core index']
  #allocation1 [shape = 'u32[72,128]{1,0:T(1,128)}', space=vmem, size = 0x9000, scoped, tag = 'internal scratch']
  %s0 = inlined_call_operand.vmem [shape: bf16[8,11], index: 0, kind: input, shape index: {}]
  %s1 = inlined_call_operand.vmem [shape: bf16[11,32], index: 1, kind: input, shape index: {}]
  %s2 = inlined_call_operand.vmem [shape: f32[1,32], index: 2, kind: input, shape index: {}]
  %s3 = inlined_call_operand.vmem [shape: bf16[32,32], index: 3, kind: input, shape index: {}]
  %s4 = inlined_call_operand.vmem [shape: f32[1,32], index: 4, kind: input, shape index: {}]
  %s5 = inlined_call_operand.vmem [shape: bf16[32,3], index: 5, kind: input, shape index: {}]
  %s6 = inlined_call_operand.vmem [shape: f32[1,3], index: 6, kind: input, shape index: {}]
  %s7 = inlined_call_operand.vmem [shape: f32[8,3], index: 7, kind: output, shape index: {}]
  %s8 = sld [smem:[#allocation0]]
  $region38: #{linear_qnet_forward.1} parent=0
    _
  %s10 = ssub.s32 1, %s8
  %s11 = scalar_select 0, %s10, %s8
  // Predicated region
  $region2: #{linear_qnet_forward.1} parent=0 // pred_check
    _
  $region3: #{linear_qnet_forward.1} parent=0 // pred_check_branch
    %13 = sbr.rel (0) target = $region5
  $region4: #{linear_qnet_forward.1} parent=0 // pred_region
    _
  $region5: #{linear_qnet_forward.1} parent=0 // pred_fallthru
    _
  // Predicated region
  $region6: #{linear_qnet_forward.1} parent=0 // pred_check
    _
  $region7: #{linear_qnet_forward.1} parent=0 // pred_check_branch
    %15 = sbr.rel (0) target = $region9
  $region8: #{linear_qnet_forward.1} parent=0 // pred_region
    _
  $region9: #{linear_qnet_forward.1} parent=0 // pred_fallthru
    _
  // Predicated region
  $region10: #{linear_qnet_forward.1} parent=0 // pred_check
    _
  $region11: #{linear_qnet_forward.1} parent=0 // pred_check_branch
    %17 = sbr.rel (0) target = $region13
  $region12: #{linear_qnet_forward.1} parent=0 // pred_region
    _
  $region13: #{linear_qnet_forward.1} parent=0 // pred_fallthru
    _
  // Predicated region
  $region14: #{linear_qnet_forward.1} parent=0 // pred_check
    _
  $region15: #{linear_qnet_forward.1} parent=0 // pred_check_branch
    %19 = sbr.rel (0) target = $region17
  $region16: #{linear_qnet_forward.1} parent=0 // pred_region
    _
  $region17: #{linear_qnet_forward.1} parent=0 // pred_fallthru
    _
  // Predicated region
  $region18: #{linear_qnet_forward.1} parent=0 // pred_check
    _
  $region19: #{linear_qnet_forward.1} parent=0 // pred_check_branch
    %21 = sbr.rel (0) target = $region21
  $region20: #{linear_qnet_forward.1} parent=0 // pred_region
    _
  $region21: #{linear_qnet_forward.1} parent=0 // pred_fallthru
    _
  // Predicated region
  $region22: #{linear_qnet_forward.1} parent=0 // pred_check
    _
  $region23: #{linear_qnet_forward.1} parent=0 // pred_check_branch
    %23 = sbr.rel (0) target = $region25
  $region24: #{linear_qnet_forward.1} parent=0 // pred_region
    _
  $region25: #{linear_qnet_forward.1} parent=0 // pred_fallthru
    _
  // Predicated region
  $region26: #{linear_qnet_forward.1} parent=0 // pred_check
    _
  $region27: #{linear_qnet_forward.1} parent=0 // pred_check_branch
    %25 = sbr.rel (0) target = $region29
  $region28: #{linear_qnet_forward.1} parent=0 // pred_region
    _
  $region29: #{linear_qnet_forward.1} parent=0 // pred_fallthru
    _
  %v27 = vld [vmem:[%s0] sm:$0xf]
  %v28 = vld [vmem:[%s1] sm:$0xf]
  %v29 = vld [vmem:[%s1 + $0x4] sm:$0x3]
  %v30 = vld [vmem:[%s2] sm:$0x1]
  %v32 = vperm.slane %v30, 0
  %v36 = vunpack.c.l.b16 %v28
  %v37 = vunpack.c.l.b16 %v29
  %v38 = vpack.c.b16 %v37, %v36
  %vm39 = vcmask 89088
  %v41 = vsel %vm39, %v27, 0
  %vm43 = vcmask 1044480
  %vm44 = vcmask 1045504
  %v45 = vsel %vm43, 4294967295, 65535
  %v46 = vsel %vm44, %v45, 0
  %v48 = vand.u32 %v38, %v46
  %50 = vmatpush.bf16.msra.mxu0 0
  %51 = vmatpush.bf16.msra.mxu0 0
  %52 = vmatpush.bf16.msra.mxu0 0
  %53 = vmatpush.bf16.msra.mxu0 0
  %54 = vmatpush.bf16.msra.mxu0 0
  %55 = vmatpush.bf16.msra.mxu0 0
  %56 = vmatpush.bf16.msra.mxu0 0
  %57 = vmatpush.bf16.msra.mxu0 %v48
  %58 = vmatmul.bf16.gmra.mxu0 %v41
  %v59 = vpop.f32.mrf.mxu0
  %v60 = vadd.f32 %v32, %v59
  %v61 = vpop.f32.mrf.mxu0
  %62 = vdwg.mxu0
  %v63 = vmax.f32 %v60, 0.0
  %v64 = vpack.c.bf16 %v63, %v63
  %v65 = vld [vmem:[%s3] sm:$0xf]
  %v66 = vld [vmem:[%s3 + $0x4] sm:$0xf]
  %v67 = vld [vmem:[%s3 + $0x8] sm:$0xf]
  %v68 = vld [vmem:[%s3 + $0xc] sm:$0xf]
  %v69 = vld [vmem:[%s4] sm:$0x1]
  %v71 = vperm.slane %v69, 0
  %v77 = vunpack.c.l.b16 %v65
  %v78 = vunpack.c.l.b16 %v66
  %v79 = vunpack.c.l.b16 %v67
  %v80 = vunpack.c.l.b16 %v68
  %v81 = vpack.c.b16 %v78, %v77
  %v82 = vpack.c.b16 %v80, %v79
  %vm85 = vcmask 261120
  %v87 = vsel %vm85, %v64, 0
  %89 = vmatpush.bf16.msra.mxu0 0
  %90 = vmatpush.bf16.msra.mxu0 0
  %91 = vmatpush.bf16.msra.mxu0 0
  %92 = vmatpush.bf16.msra.mxu0 0
  %93 = vmatpush.bf16.msra.mxu0 0
  %94 = vmatpush.bf16.msra.mxu0 0
  %95 = vmatpush.bf16.msra.mxu0 %v82
  %96 = vmatpush.bf16.msra.mxu0 %v81
  %97 = vmatmul.bf16.gmra.mxu0 %v87
  %v98 = vpop.f32.mrf.mxu0
  %v99 = vadd.f32 %v71, %v98
  %v100 = vpop.f32.mrf.mxu0
  %101 = vdwg.mxu0
  %v102 = vmax.f32 %v99, 0.0
  %v103 = vpack.c.bf16 %v102, %v102
  %v104 = vld [vmem:[%s5] sm:$0xf]
  %v105 = vld [vmem:[%s5 + $0x4] sm:$0xf]
  %v106 = vld [vmem:[%s5 + $0x8] sm:$0xf]
  %v107 = vld [vmem:[%s5 + $0xc] sm:$0xf]
  %v108 = vld [vmem:[%s6] sm:$0x1]
  %v110 = vperm.slane %v108, 0
  %v116 = vunpack.c.l.b16 %v104
  %v117 = vunpack.c.l.b16 %v105
  %v118 = vunpack.c.l.b16 %v106
  %v119 = vunpack.c.l.b16 %v107
  %v120 = vpack.c.b16 %v117, %v116
  %v121 = vpack.c.b16 %v119, %v118
  %v125 = vsel %vm85, %v103, 0
  %127 = vmatpush.bf16.msra.mxu0 0
  %128 = vmatpush.bf16.msra.mxu0 0
  %129 = vmatpush.bf16.msra.mxu0 0
  %130 = vmatpush.bf16.msra.mxu0 0
  %131 = vmatpush.bf16.msra.mxu0 0
  %132 = vmatpush.bf16.msra.mxu0 0
  %133 = vmatpush.bf16.msra.mxu0 %v121
  %134 = vmatpush.bf16.msra.mxu0 %v120
  %135 = vmatmul.bf16.gmra.mxu0 %v125
  %v136 = vpop.f32.mrf.mxu0
  %v137 = vadd.f32 %v110, %v136
  %v138 = vpop.f32.mrf.mxu0
  %139 = vdwg.mxu0
  %vm140 = vcmask 23552
  %141 = vst.msk [vmem:[%s7] sm:$0xff] %vm140, %v137
  // Predicated region
  $region30: #{linear_qnet_forward.1} parent=0 // pred_check
    _
  $region31: #{linear_qnet_forward.1} parent=0 // pred_check_branch
    %143 = sbr.rel (0) target = $region33
  $region32: #{linear_qnet_forward.1} parent=0 // pred_region
    _
  $region33: #{linear_qnet_forward.1} parent=0 // pred_fallthru
    _
  // Predicated region
  $region34: #{linear_qnet_forward.1} parent=0 // pred_check
    _
  $region35: #{linear_qnet_forward.1} parent=0 // pred_check_branch
    %145 = sbr.rel (0) target = $region37
  $region36: #{linear_qnet_forward.1} parent=0 // pred_region
    _
  $region37: #{linear_qnet_forward.1} parent=0 // pred_fallthru
    _

</llo_original>
